<compile_context>
chip_gen: v7x
topology: tpu7x:2x2x1
jax: 0.10.0
libtpu: 0.0.40
codegen_flags: <defaults>
</compile_context>

<pallas_src>
import math

import jax
import jax.numpy as jnp
from jax.experimental import pallas as pl
from jax.experimental.pallas import tpu as pltpu


LANE = 128
# Scoped-VMEM budget: safe on v7x (64 MiB/TC) while well above the 32 MiB default.
_VMEM_LIMIT = 48 * 1024 * 1024


def _round_up(x, m):
    return ((x + m - 1) // m) * m


def _pad2d(x, rows, cols):
    r, c = x.shape
    if r == rows and c == cols:
        return x
    return jnp.pad(x, ((0, rows - r), (0, cols - c)))


def _pick_tile(dim, preferred):
    t = min(preferred, dim)
    while t > LANE and dim % t != 0:
        t //= 2
    return t if dim % t == 0 else dim


def _pick_row_tile(m, preferred):
    """Row tile; try to keep >= 2 row tiles so the 'parallel' axis can be
    sharded across v7x's two TensorCores."""
    tm = _pick_tile(m, preferred)
    if m > LANE and m // tm < 2:
        tm = _pick_tile(m, max(LANE, tm // 2))
    return tm


# --------------------------------------------------------------------------
# Fused kernel:  out = (A @ X) @ W + b    (in_dim <= out_dim path)
# Grid = (rows_of_A, reduction_over_N);  W and bias stay resident in VMEM.
# --------------------------------------------------------------------------
def _gcn_fused_kernel(a_ref, x_ref, w_ref, b_ref, o_ref, acc_ref):
    k = pl.program_id(1)
    prod = jnp.dot(a_ref[...], x_ref[...], preferred_element_type=jnp.float32)

    @pl.when(k == 0)
    def _init():
        acc_ref[...] = prod

    @pl.when(k != 0)
    def _accum():
        acc_ref[...] += prod

    @pl.when(k == pl.num_programs(1) - 1)
    def _project_store():
        proj = jnp.dot(
            acc_ref[...].astype(w_ref.dtype), w_ref[...],
            preferred_element_type=jnp.float32,
        )
        o_ref[...] = (proj + b_ref[...].astype(jnp.float32)).astype(o_ref.dtype)


def _gcn_fused(a_p, x_p, w_p, b_p, *, out_dtype, tm=256, tk=1024):
    n_p, n_p2 = a_p.shape
    _, in_p = x_p.shape
    _, out_p = w_p.shape
    assert n_p == n_p2
    tm = _pick_row_tile(n_p, tm)
    tk = _pick_tile(n_p, tk)
    grid = (n_p // tm, n_p // tk)

    itemsize = jnp.dtype(a_p.dtype).itemsize
    cost = pl.CostEstimate(
        flops=2 * n_p * n_p * in_p + 2 * n_p * in_p * out_p,
        transcendentals=0,
        bytes_accessed=(
            n_p * n_p * itemsize                       # A streamed exactly once
            + (n_p // tm) * n_p * in_p * itemsize      # X re-read per row tile
            + in_p * out_p * itemsize                  # W resident
            + out_p * 4                                # bias
            + n_p * out_p * jnp.dtype(out_dtype).itemsize
        ),
    )

    return pl.pallas_call(
        _gcn_fused_kernel,
        out_shape=jax.ShapeDtypeStruct((n_p, out_p), out_dtype),
        grid_spec=pltpu.PrefetchScalarGridSpec(
            num_scalar_prefetch=0,
            grid=grid,
            in_specs=[
                pl.BlockSpec((tm, tk), lambda i, k: (i, k)),       # A tile
                pl.BlockSpec((tk, in_p), lambda i, k: (k, 0)),     # X, full width
                pl.BlockSpec((in_p, out_p), lambda i, k: (0, 0)),  # W, resident
                pl.BlockSpec((1, out_p), lambda i, k: (0, 0)),     # bias
            ],
            out_specs=pl.BlockSpec((tm, out_p), lambda i, k: (i, 0)),
            scratch_shapes=[pltpu.VMEM((tm, in_p), jnp.float32)],
        ),
        compiler_params=pltpu.CompilerParams(
            dimension_semantics=("parallel", "arbitrary"),
            vmem_limit_bytes=_VMEM_LIMIT,
        ),
        cost_estimate=cost,
    )(a_p, x_p, w_p, b_p)


# --------------------------------------------------------------------------
# Plain tiled matmul (optionally + bias) for the in_dim > out_dim path.
# --------------------------------------------------------------------------
def _matmul_kernel(a_ref, b_ref, o_ref, acc_ref):
    k = pl.program_id(2)
    prod = jnp.dot(a_ref[...], b_ref[...], preferred_element_type=jnp.float32)

    @pl.when(k == 0)
    def _init():
        acc_ref[...] = prod

    @pl.when(k != 0)
    def _accum():
        acc_ref[...] += prod

    @pl.when(k == pl.num_programs(2) - 1)
    def _store():
        o_ref[...] = acc_ref[...].astype(o_ref.dtype)


def _matmul_bias_kernel(a_ref, b_ref, bias_ref, o_ref, acc_ref):
    k = pl.program_id(2)
    prod = jnp.dot(a_ref[...], b_ref[...], preferred_element_type=jnp.float32)

    @pl.when(k == 0)
    def _init():
        acc_ref[...] = prod

    @pl.when(k != 0)
    def _accum():
        acc_ref[...] += prod

    @pl.when(k == pl.num_programs(2) - 1)
    def _store():
        o_ref[...] = (acc_ref[...] + bias_ref[...].astype(jnp.float32)).astype(
            o_ref.dtype
        )


def _matmul(a, b, bias2d=None, *, out_dtype=None, tm=256, tk=1024, tn_max=1024):
    """Tiled (a @ b) [+ bias] on the MXU.  All dims must be 128-aligned."""
    m, k = a.shape
    k2, n = b.shape
    assert k == k2
    out_dtype = out_dtype if out_dtype is not None else a.dtype
    tm = _pick_row_tile(m, tm)
    # Full output lane width when it fits VMEM, so each `a` tile is DMA'd once.
    tn = n if n <= tn_max else _pick_tile(n, 512)
    tk = _pick_tile(k, tk)
    grid = (m // tm, n // tn, k // tk)

    a_item = jnp.dtype(a.dtype).itemsize
    b_item = jnp.dtype(b.dtype).itemsize
    cost = pl.CostEstimate(
        flops=2 * m * n * k,
        transcendentals=0,
        bytes_accessed=(
            (n // tn) * m * k * a_item         # a re-read per output col tile
            + (m // tm) * k * n * b_item       # b re-read per output row tile
            + m * n * jnp.dtype(out_dtype).itemsize
            + (n * 4 if bias2d is not None else 0)
        ),
    )

    if bias2d is None:
        kernel = _matmul_kernel
        operands = (a, b)
        in_specs = [
            pl.BlockSpec((tm, tk), lambda i, j, kk: (i, kk)),
            pl.BlockSpec((tk, tn), lambda i, j, kk: (kk, j)),
        ]
    else:
        kernel = _matmul_bias_kernel
        operands = (a, b, bias2d)
        in_specs = [
            pl.BlockSpec((tm, tk), lambda i, j, kk: (i, kk)),
            pl.BlockSpec((tk, tn), lambda i, j, kk: (kk, j)),
            pl.BlockSpec((1, tn), lambda i, j, kk: (0, j)),
        ]

    return pl.pallas_call(
        kernel,
        out_shape=jax.ShapeDtypeStruct((m, n), out_dtype),
        grid_spec=pltpu.PrefetchScalarGridSpec(
            num_scalar_prefetch=0,
            grid=grid,
            in_specs=in_specs,
            out_specs=pl.BlockSpec((tm, tn), lambda i, j, kk: (i, j)),
            scratch_shapes=[pltpu.VMEM((tm, tn), jnp.float32)],
        ),
        compiler_params=pltpu.CompilerParams(
            dimension_semantics=("parallel", "parallel", "arbitrary"),
            vmem_limit_bytes=_VMEM_LIMIT,
        ),
        cost_estimate=cost,
    )(*operands)


# --------------------------------------------------------------------------
# Public wrapper — mirrors GraphConvolution.forward (dense adjacency).
# --------------------------------------------------------------------------
def graph_convolution(adjacency, input_feature, weight, bias=None,
                      *, compute_dtype=None):
    """Pallas equivalent of GraphConvolution.forward.

    compute_dtype: optional dtype (e.g. jnp.bfloat16) for A/X/W on the MXU;
    accumulation, bias add and the output stay f32-accurate.
    """
    # TODO(synk): torch.sparse.mm is realized densely; a CSR / blocked-sparse
    # variant via PrefetchScalarGridSpec row-pointer prefetch could skip zero
    # column-blocks for genuinely sparse graphs.
    n = adjacency.shape[0]
    in_dim, out_dim = weight.shape
    out_dtype = input_feature.dtype
    cdtype = compute_dtype if compute_dtype is not None else out_dtype

    n_p = _round_up(n, LANE)
    in_p = _round_up(in_dim, LANE)
    out_p = _round_up(out_dim, LANE)

    # TODO(synk): for large graphs with N % 128 != 0, handle the ragged last
    # row/col tile in-kernel (masked epilogue) instead of materialising a
    # padded copy of the O(N^2) adjacency here (no-op when already aligned).
    a_p = _pad2d(adjacency.astype(cdtype), n_p, n_p)
    x_p = _pad2d(input_feature.astype(cdtype), n_p, in_p)
    w_p = _pad2d(weight.astype(cdtype), in_p, out_p)
    if bias is None:
        b_p = None
    else:
        b_p = _pad2d(bias.astype(jnp.float32).reshape(1, out_dim), 1, out_p)

    if in_p <= out_p and max(in_p, out_p) <= 1024:
        # Single fused kernel: the O(N^2) contraction runs at the narrower
        # width; W projection + bias happen in the VMEM epilogue.
        bias_full = b_p if b_p is not None else jnp.zeros((1, out_p), jnp.float32)
        out = _gcn_fused(a_p, x_p, w_p, bias_full, out_dtype=out_dtype)
    else:
        # support = X @ W computed ONCE (bias-free kernel), then
        # out = A @ support + b with full out_p lane width (A streamed once).
        support = _matmul(x_p, w_p, None, out_dtype=cdtype)
        out = _matmul(a_p, support, b_p, out_dtype=out_dtype)

    return out[:n, :out_dim]


def init_params(key, input_dim, output_dim, use_bias=True):
    """kaiming_uniform_ on weight (fan_in = weight.size(1) = output_dim,
    gain = sqrt(2)), zeros on bias — mirrors reset_parameters()."""
    fan_in = output_dim
    gain = math.sqrt(2.0)
    bound = gain * math.sqrt(3.0 / fan_in)
    weight = jax.random.uniform(
        key, (input_dim, output_dim), dtype=jnp.float32,
        minval=-bound, maxval=bound,
    )
    bias = jnp.zeros((output_dim,), dtype=jnp.float32) if use_bias else None
    return weight, bias


if __name__ == "__main__":
    key = jax.random.PRNGKey(0)
    k_adj, k_x, k_w = jax.random.split(key, 3)

    N = 16           # number of graph nodes
    INPUT_DIM = 32   # node input feature dim
    OUTPUT_DIM = 64  # output feature dim

    # Deterministic (dense) normalized-ish adjacency matrix.
    adj_raw = (jax.random.uniform(k_adj, (N, N), dtype=jnp.float32) > 0.7).astype(
        jnp.float32
    )
    adj = adj_raw + jnp.eye(N, dtype=jnp.float32)
    deg = jnp.sum(adj, axis=1, keepdims=True)
    adjacency = adj / deg

    input_feature = jax.random.normal(k_x, (N, INPUT_DIM), dtype=jnp.float32)
    weight, bias = init_params(k_w, INPUT_DIM, OUTPUT_DIM, use_bias=True)

    ref = adjacency @ (input_feature @ weight) + bias

    # f32 path (fused single-kernel branch: in_dim <= out_dim).
    out = jax.block_until_ready(
        graph_convolution(adjacency, input_feature, weight, bias)
    )
    assert out.shape == (N, OUTPUT_DIM)
    assert jnp.allclose(out, ref, atol=1e-4, rtol=1e-4), float(
        jnp.max(jnp.abs(out - ref))
    )

    # bf16 inputs / f32 accumulate (v6e / v7x MXU + bandwidth win), loose tol.
    out_bf16 = jax.block_until_ready(
        graph_convolution(adjacency, input_feature, weight, bias,
                          compute_dtype=jnp.bfloat16)
    )
    assert jnp.allclose(out_bf16, ref, atol=5e-2, rtol=5e-2), float(
        jnp.max(jnp.abs(out_bf16 - ref))
    )

    # Exercise the in_dim > out_dim branch (support once, then A @ support + b).
    IN2, OUT2 = 192, 64
    k_x2, k_w2 = jax.random.split(k_w)
    x2 = jax.random.normal(k_x2, (N, IN2), dtype=jnp.float32)
    w2, b2 = init_params(k_w2, IN2, OUT2, use_bias=True)
    ref2 = adjacency @ (x2 @ w2) + b2
    out2 = jax.block_until_ready(graph_convolution(adjacency, x2, w2, b2))
    assert jnp.allclose(out2, ref2, atol=1e-4, rtol=1e-4), float(
        jnp.max(jnp.abs(out2 - ref2))
    )

    print("KERNEL_OK")
</pallas_src>

<mosaic_0001>
module attributes {stable_mosaic.version = 11 : i64} {
  func.func @_gcn_fused_kernel(%arg0: i32, %arg1: i32, %arg2: memref<128x128xf32, #tpu.memory_space<vmem>>, %arg3: memref<128x128xf32, #tpu.memory_space<vmem>>, %arg4: memref<128x128xf32, #tpu.memory_space<vmem>>, %arg5: memref<1x128xf32, #tpu.memory_space<vmem>>, %arg6: memref<128x128xf32, #tpu.memory_space<vmem>>, %arg7: memref<128x128xf32, #tpu.memory_space<vmem>>) attributes {dimension_semantics = [#tpu.dimension_semantics<parallel>, #tpu.dimension_semantics<arbitrary>], iteration_bounds = array<i64: 1, 1>, scalar_prefetch = 0 : i64, scratch_operands = 1 : i64, tpu.core_type = #tpu.core_type<tc>, window_params = [{transform_indices = @transform_0, window_bounds = array<i64: 128, 128>}, {transform_indices = @transform_1, window_bounds = array<i64: 128, 128>}, {pipeline_mode = #tpu.pipeline_mode<synchronous>, transform_indices = @transform_2, window_bounds = array<i64: 128, 128>}, {pipeline_mode = #tpu.pipeline_mode<synchronous>, transform_indices = @transform_3, window_bounds = array<i64: 1, 128>}, {transform_indices = @transform_4, window_bounds = array<i64: 128, 128>}]} {
    %c0 = arith.constant 0 : index
    %c0_0 = arith.constant 0 : index
    %0 = vector.load %arg2[%c0, %c0_0] : memref<128x128xf32, #tpu.memory_space<vmem>>, vector<128x128xf32>
    %c0_1 = arith.constant 0 : index
    %c0_2 = arith.constant 0 : index
    %1 = vector.load %arg3[%c0_1, %c0_2] : memref<128x128xf32, #tpu.memory_space<vmem>>, vector<128x128xf32>
    %cst = arith.constant dense<0.000000e+00> : vector<128x128xf32>
    %2 = tpu.matmul %0, %1, %cst {dimension_numbers = #tpu.dot_dimension_numbers<[1], [0], [0], [1], [0, 0, 1, 1], [], []>} : vector<128x128xf32>, vector<128x128xf32>, vector<128x128xf32> -> vector<128x128xf32>
    %c0_i32 = arith.constant 0 : i32
    %3 = arith.cmpi eq, %arg1, %c0_i32 : i32
    %4 = arith.extui %3 : i1 to i32
    %c0_i32_3 = arith.constant 0 : i32
    %5 = arith.cmpi ne, %4, %c0_i32_3 : i32
    scf.if %5 {
      %c0_8 = arith.constant 0 : index
      %c0_9 = arith.constant 0 : index
      %12 = vector.load %arg7[%c0_8, %c0_9] : memref<128x128xf32, #tpu.memory_space<vmem>>, vector<128x128xf32>
      tpu.vector_store %arg7[%c0_8, %c0_9], %2 {strides = array<i32>} : memref<128x128xf32, #tpu.memory_space<vmem>>, vector<128x128xf32>,
    } else {
    }
    %c0_i32_4 = arith.constant 0 : i32
    %6 = arith.cmpi ne, %arg1, %c0_i32_4 : i32
    %7 = arith.extui %6 : i1 to i32
    %c0_i32_5 = arith.constant 0 : i32
    %8 = arith.cmpi ne, %7, %c0_i32_5 : i32
    scf.if %8 {
      %c0_8 = arith.constant 0 : index
      %c0_9 = arith.constant 0 : index
      %12 = vector.load %arg7[%c0_8, %c0_9] : memref<128x128xf32, #tpu.memory_space<vmem>>, vector<128x128xf32>
      %13 = arith.addf %12, %2 : vector<128x128xf32>
      %c0_10 = arith.constant 0 : index
      %c0_11 = arith.constant 0 : index
      %14 = vector.load %arg7[%c0_10, %c0_11] : memref<128x128xf32, #tpu.memory_space<vmem>>, vector<128x128xf32>
      tpu.vector_store %arg7[%c0_10, %c0_11], %13 {strides = array<i32>} : memref<128x128xf32, #tpu.memory_space<vmem>>, vector<128x128xf32>,
    } else {
    }
    %c0_i32_6 = arith.constant 0 : i32
    %9 = arith.cmpi eq, %arg1, %c0_i32_6 : i32
    %10 = arith.extui %9 : i1 to i32
    %c0_i32_7 = arith.constant 0 : i32
    %11 = arith.cmpi ne, %10, %c0_i32_7 : i32
    scf.if %11 {
      %c0_8 = arith.constant 0 : index
      %c0_9 = arith.constant 0 : index
      %12 = vector.load %arg7[%c0_8, %c0_9] : memref<128x128xf32, #tpu.memory_space<vmem>>, vector<128x128xf32>
      %c0_10 = arith.constant 0 : index
      %c0_11 = arith.constant 0 : index
      %13 = vector.load %arg4[%c0_10, %c0_11] : memref<128x128xf32, #tpu.memory_space<vmem>>, vector<128x128xf32>
      %cst_12 = arith.constant dense<0.000000e+00> : vector<128x128xf32>
      %14 = tpu.matmul %12, %13, %cst_12 {dimension_numbers = #tpu.dot_dimension_numbers<[1], [0], [0], [1], [0, 0, 1, 1], [], []>} : vector<128x128xf32>, vector<128x128xf32>, vector<128x128xf32> -> vector<128x128xf32>
      %c0_13 = arith.constant 0 : index
      %c0_14 = arith.constant 0 : index
      %15 = vector.load %arg5[%c0_13, %c0_14] : memref<1x128xf32, #tpu.memory_space<vmem>>, vector<1x128xf32>
      %16 = vector.broadcast %15 : vector<1x128xf32> to vector<128x128xf32>
      %17 = arith.addf %14, %16 : vector<128x128xf32>
      %c0_15 = arith.constant 0 : index
      %c0_16 = arith.constant 0 : index
      %18 = vector.load %arg6[%c0_15, %c0_16] : memref<128x128xf32, #tpu.memory_space<vmem>>, vector<128x128xf32>
      tpu.vector_store %arg6[%c0_15, %c0_16], %17 {strides = array<i32>} : memref<128x128xf32, #tpu.memory_space<vmem>>, vector<128x128xf32>,
    } else {
    }
    return
  }
  func.func @transform_0(%arg0: i32, %arg1: i32) -> (i32, i32) {
    %c0_i32 = arith.constant 0 : i32
    return %arg0, %arg1 : i32, i32
  }
  func.func @transform_1(%arg0: i32, %arg1: i32) -> (i32, i32) {
    %c0_i32 = arith.constant 0 : i32
    %c0_i32_0 = arith.constant 0 : i32
    return %arg1, %c0_i32 : i32, i32
  }
  func.func @transform_2(%arg0: i32, %arg1: i32) -> (i32, i32) {
    %c0_i32 = arith.constant 0 : i32
    %c0_i32_0 = arith.constant 0 : i32
    %c0_i32_1 = arith.constant 0 : i32
    return %c0_i32, %c0_i32_0 : i32, i32
  }
  func.func @transform_3(%arg0: i32, %arg1: i32) -> (i32, i32) {
    %c0_i32 = arith.constant 0 : i32
    %c0_i32_0 = arith.constant 0 : i32
    %c0_i32_1 = arith.constant 0 : i32
    return %c0_i32, %c0_i32_0 : i32, i32
  }
  func.func @transform_4(%arg0: i32, %arg1: i32) -> (i32, i32) {
    %c0_i32 = arith.constant 0 : i32
    %c0_i32_0 = arith.constant 0 : i32
    return %arg0, %c0_i32 : i32, i32
  }
}

</mosaic_0001>

<llo_original>
// kernel: tpu_custom_call.1
$region0: #{tpu_custom_call.1}
  #allocation0 [shape = 'u32[]', space=smem, size = 0x4, offset = 0x4, fixed_abs, tag = 'smem constant byte address 0x4 - core index']
  #allocation1 [shape = 'u32[144,128]{1,0:T(1,128)}', space=vmem, size = 0x12000, scoped, tag = 'internal scratch']
  #allocation2 [shape = 'f32[128,128]{1,0:T(8,128)}', space=vmem, size = 0x10000, scoped, tag = 'scratch operand']
  %s0 = inlined_call_operand.hbm [shape: f32[128,128], index: 0, kind: input, shape index: {}]
  %s1 = inlined_call_operand.hbm [shape: f32[128,128], index: 1, kind: input, shape index: {}]
  %s2 = inlined_call_operand.hbm [shape: f32[128,128], index: 2, kind: input, shape index: {}]
  %s3 = inlined_call_operand.vmem [shape: f32[1,128], index: 3, kind: input, shape index: {}]
  %s4 = inlined_call_operand.hbm [shape: f32[128,128], index: 4, kind: output, shape index: {}]
  %s5 = sld [smem:[#allocation0]]
  $region50: #{tpu_custom_call.1} parent=0
    _
  %s7 = ssub.s32 1, %s5
  %s8 = scalar_select 0, %s7, %s5
  $region1: #{tpu_custom_call.1} parent=0
    #allocation3 [shape = 'u8[65536]{0}', space=vmem, size = 0x10000, scoped, tag = 'input window, operand 0, single buffered']
    #allocation4 [shape = 's32[1]{0}', space=sflag, size = 0x4, scoped, tag = 'scoped memory for tpu_custom_call.1']
    #allocation5 [shape = 's32[1]{0}', space=sflag, size = 0x4, scoped, tag = 'scoped memory for tpu_custom_call.1']
    #allocation6 [shape = 'u8[65536]{0}', space=vmem, size = 0x10000, scoped, tag = 'input window, operand 1, single buffered']
    #allocation7 [shape = 's32[1]{0}', space=sflag, size = 0x4, scoped, tag = 'scoped memory for tpu_custom_call.1']
    #allocation8 [shape = 'u8[65536]{0}', space=vmem, size = 0x10000, scoped, tag = 'input window, operand 2, single buffered']
    #allocation9 [shape = 'u8[65536]{0}', space=vmem, size = 0x10000, scoped, tag = 'output window, operand 0, single buffered']
    %9 = vsyncpa [#allocation4], 0
    %10 = vsyncpa [#allocation7], 0
    %11 = vsyncpa [#allocation5], 0
    // Predicated region
    $region2: #{tpu_custom_call.1} parent=1 // pred_check
      _
    $region3: #{tpu_custom_call.1} parent=1 // pred_check_branch
      %13 = sbr.rel (0) target = $region5
    $region4: #{tpu_custom_call.1} parent=1 // pred_region
      %s15 = ssub.s32 2048, 2048
      %16 = vsyncadd [#allocation4], %s15
      %s17 = sshll.u32 [#allocation3], 4
      %s18 = int_to_ptr.vmem [resolvable:$true] %s17
      %23 = dma.hbm_to_vmem [thread:$0]  %s0, 2048, %s18, [#allocation4], 128, 128, 8
    $region5: #{tpu_custom_call.1} parent=1 // pred_fallthru
      _
    // Predicated region
    $region6: #{tpu_custom_call.1} parent=1 // pred_check
      _
    $region7: #{tpu_custom_call.1} parent=1 // pred_check_branch
      %25 = sbr.rel (0) target = $region9
    $region8: #{tpu_custom_call.1} parent=1 // pred_region
      %s27 = ssub.s32 2048, 2048
      %28 = vsyncadd [#allocation7], %s27
      %s29 = sshll.u32 [#allocation6], 4
      %s30 = int_to_ptr.vmem [resolvable:$true] %s29
      %35 = dma.hbm_to_vmem [thread:$0]  %s1, 2048, %s30, [#allocation7], 128, 128, 8
    $region9: #{tpu_custom_call.1} parent=1 // pred_fallthru
      _
    // Predicated region
    $region10: #{tpu_custom_call.1} parent=1 // pred_check
      _
    $region11: #{tpu_custom_call.1} parent=1 // pred_check_branch
      %37 = sbr.rel (0) target = $region13
    $region12: #{tpu_custom_call.1} parent=1 // pred_region
      %s39 = ssub.s32 2048, 2048
      %40 = vsyncadd [#allocation7], %s39
      %s41 = sshll.u32 [#allocation8], 4
      %s42 = int_to_ptr.vmem [resolvable:$true] %s41
      %47 = dma.hbm_to_vmem [thread:$0]  %s2, 2048, %s42, [#allocation7], 128, 128, 8
    $region13: #{tpu_custom_call.1} parent=1 // pred_fallthru
      _
    // Predicated region
    $region14: #{tpu_custom_call.1} parent=1 // pred_check
      _
    $region15: #{tpu_custom_call.1} parent=1 // pred_check_branch
      %49 = sbr.rel (0) target = $region17
    $region16: #{tpu_custom_call.1} parent=1 // pred_region
      _
    $region17: #{tpu_custom_call.1} parent=1 // pred_fallthru
      _
    // Predicated region
    $region18: #{tpu_custom_call.1} parent=1 // pred_check
      _
    $region19: #{tpu_custom_call.1} parent=1 // pred_check_branch
      %51 = sbr.rel (0) target = $region21
    $region20: #{tpu_custom_call.1} parent=1 // pred_region
      %52 = dma.done [#allocation4], 2048
    $region21: #{tpu_custom_call.1} parent=1 // pred_fallthru
      _
    // Predicated region
    $region22: #{tpu_custom_call.1} parent=1 // pred_check
      _
    $region23: #{tpu_custom_call.1} parent=1 // pred_check_branch
      %54 = sbr.rel (0) target = $region25
    $region24: #{tpu_custom_call.1} parent=1 // pred_region
      %55 = dma.done [#allocation7], 2048
    $region25: #{tpu_custom_call.1} parent=1 // pred_fallthru
      _
    // Predicated region
    $region26: #{tpu_custom_call.1} parent=1 // pred_check
      _
    $region27: #{tpu_custom_call.1} parent=1 // pred_check_branch
      %57 = sbr.rel (0) target = $region29
    $region28: #{tpu_custom_call.1} parent=1 // pred_region
      %58 = dma.done [#allocation7], 2048
    $region29: #{tpu_custom_call.1} parent=1 // pred_fallthru
      _
    %v59 = vld [vmem:[#allocation3] sm:$0xff]
    %v60 = vld [vmem:[#allocation3 + $0x8] sm:$0xff]
    %v61 = vld [vmem:[#allocation3 + $0x10] sm:$0xff]
    %v62 = vld [vmem:[#allocation3 + $0x18] sm:$0xff]
    %v63 = vld [vmem:[#allocation3 + $0x20] sm:$0xff]
    %v64 = vld [vmem:[#allocation3 + $0x28] sm:$0xff]
    %v65 = vld [vmem:[#allocation3 + $0x30] sm:$0xff]
    %v66 = vld [vmem:[#allocation3 + $0x38] sm:$0xff]
    %v67 = vld [vmem:[#allocation3 + $0x40] sm:$0xff]
    %v68 = vld [vmem:[#allocation3 + $0x48] sm:$0xff]
    %v69 = vld [vmem:[#allocation3 + $0x50] sm:$0xff]
    %v70 = vld [vmem:[#allocation3 + $0x58] sm:$0xff]
    %v71 = vld [vmem:[#allocation3 + $0x60] sm:$0xff]
    %v72 = vld [vmem:[#allocation3 + $0x68] sm:$0xff]
    %v73 = vld [vmem:[#allocation3 + $0x70] sm:$0xff]
    %v74 = vld [vmem:[#allocation3 + $0x78] sm:$0xff]
    %v75 = vld [vmem:[#allocation6] sm:$0xff]
    %v76 = vld [vmem:[#allocation6 + $0x8] sm:$0xff]
    %v77 = vld [vmem:[#allocation6 + $0x10] sm:$0xff]
    %v78 = vld [vmem:[#allocation6 + $0x18] sm:$0xff]
    %v79 = vld [vmem:[#allocation6 + $0x20] sm:$0xff]
    %v80 = vld [vmem:[#allocation6 + $0x28] sm:$0xff]
    %v81 = vld [vmem:[#allocation6 + $0x30] sm:$0xff]
    %v82 = vld [vmem:[#allocation6 + $0x38] sm:$0xff]
    %v83 = vld [vmem:[#allocation6 + $0x40] sm:$0xff]
    %v84 = vld [vmem:[#allocation6 + $0x48] sm:$0xff]
    %v85 = vld [vmem:[#allocation6 + $0x50] sm:$0xff]
    %v86 = vld [vmem:[#allocation6 + $0x58] sm:$0xff]
    %v87 = vld [vmem:[#allocation6 + $0x60] sm:$0xff]
    %v88 = vld [vmem:[#allocation6 + $0x68] sm:$0xff]
    %v89 = vld [vmem:[#allocation6 + $0x70] sm:$0xff]
    %v90 = vld [vmem:[#allocation6 + $0x78] sm:$0xff]
    %91 = vmatprep.subr.mxu0 0.0
    %92 = vmatpush1.msra.mxu0 %v75
    %93 = vmatprep.subr.mxu0 0.0
    %94 = vmatpush1.msra.mxu0 %v76
    %95 = vmatprep.subr.mxu0 0.0
    %96 = vmatpush1.msra.mxu0 %v77
    %97 = vmatprep.subr.mxu0 0.0
    %98 = vmatpush1.msra.mxu0 %v78
    %99 = vmatprep.subr.mxu0 0.0
    %100 = vmatpush1.msra.mxu0 %v79
    %101 = vmatprep.subr.mxu0 0.0
    %102 = vmatpush1.msra.mxu0 %v80
    %103 = vmatprep.subr.mxu0 0.0
    %104 = vmatpush1.msra.mxu0 %v81
    %105 = vmatprep.subr.mxu0 0.0
    %106 = vmatpush1.msra.mxu0 %v82
    %107 = vmatprep.subr.mxu0 0.0
    %108 = vmatpush1.msra.mxu0 %v83
    %109 = vmatprep.subr.mxu0 0.0
    %110 = vmatpush1.msra.mxu0 %v84
    %111 = vmatprep.subr.mxu0 0.0
    %112 = vmatpush1.msra.mxu0 %v85
    %113 = vmatprep.subr.mxu0 0.0
    %114 = vmatpush1.msra.mxu0 %v86
    %115 = vmatprep.subr.mxu0 0.0
    %116 = vmatpush1.msra.mxu0 %v87
    %117 = vmatprep.subr.mxu0 0.0
    %118 = vmatpush1.msra.mxu0 %v88
    %119 = vmatprep.subr.mxu0 0.0
    %120 = vmatpush1.msra.mxu0 %v89
    %121 = vmatprep.subr.mxu0 0.0
    %122 = vmatpush1.msra.mxu0 %v90
    %123 = vmatprep.subr.mxu0 0.0
    %124 = vmatpush1.msra.mxu0 0.0
    %125 = vmatprep.subr.mxu0 0.0
    %126 = vmatpush1.msra.mxu0 0.0
    %127 = vmatprep.subr.mxu0 0.0
    %128 = vmatpush1.msra.mxu0 0.0
    %129 = vmatprep.subr.mxu0 0.0
    %130 = vmatpush1.msra.mxu0 0.0
    %131 = vmatprep.subr.mxu0 0.0
    %132 = vmatpush1.msra.mxu0 0.0
    %133 = vmatprep.subr.mxu0 0.0
    %134 = vmatpush1.msra.mxu0 0.0
    %135 = vmatprep.subr.mxu0 0.0
    %136 = vmatpush1.msra.mxu0 0.0
    %137 = vmatprep.subr.mxu0 0.0
    %138 = vmatpush1.msra.mxu0 0.0
    %139 = vmatprep.subr.mxu0 0.0
    %140 = vmatpush1.msra.mxu0 0.0
    %141 = vmatprep.subr.mxu0 0.0
    %142 = vmatpush1.msra.mxu0 0.0
    %143 = vmatprep.subr.mxu0 0.0
    %144 = vmatpush1.msra.mxu0 0.0
    %145 = vmatprep.subr.mxu0 0.0
    %146 = vmatpush1.msra.mxu0 0.0
    %147 = vmatprep.subr.mxu0 0.0
    %148 = vmatpush1.msra.mxu0 0.0
    %149 = vmatprep.subr.mxu0 0.0
    %150 = vmatpush1.msra.mxu0 0.0
    %151 = vmatprep.subr.mxu0 0.0
    %152 = vmatpush1.msra.mxu0 0.0
    %153 = vmatprep.subr.mxu0 0.0
    %154 = vmatpush1.msra.mxu0 0.0
    %155 = vmatprep.mubr.f32.mxu0 0.0
    %156 = vmatmul.mubr.f32.gmra.mrb[0].mxu0 %v59
    %v157 = vpop.f32.mrb[0].mxu0
    %v158 = vadd.f32 0.0, %v157
    %v159 = vpop.f32.mrb[0].mxu0
    %160 = vmatprep.mubr.f32.mxu0 0.0
    %161 = vmatmul.mubr.f32.gmra.mrb[0].mxu0 %v60
    %v162 = vpop.f32.mrb[0].mxu0
    %v163 = vadd.f32 0.0, %v162
    %v164 = vpop.f32.mrb[0].mxu0
    %165 = vmatprep.mubr.f32.mxu0 0.0
    %166 = vmatmul.mubr.f32.gmra.mrb[0].mxu0 %v61
    %v167 = vpop.f32.mrb[0].mxu0
    %v168 = vadd.f32 0.0, %v167
    %v169 = vpop.f32.mrb[0].mxu0
    %170 = vmatprep.mubr.f32.mxu0 0.0
    %171 = vmatmul.mubr.f32.gmra.mrb[0].mxu0 %v62
    %v172 = vpop.f32.mrb[0].mxu0
    %v173 = vadd.f32 0.0, %v172
    %v174 = vpop.f32.mrb[0].mxu0
    %175 = vmatprep.mubr.f32.mxu0 0.0
    %176 = vmatmul.mubr.f32.gmra.mrb[0].mxu0 %v63
    %v177 = vpop.f32.mrb[0].mxu0
    %v178 = vadd.f32 0.0, %v177
    %v179 = vpop.f32.mrb[0].mxu0
    %180 = vmatprep.mubr.f32.mxu0 0.0
    %181 = vmatmul.mubr.f32.gmra.mrb[0].mxu0 %v64
    %v182 = vpop.f32.mrb[0].mxu0
    %v183 = vadd.f32 0.0, %v182
    %v184 = vpop.f32.mrb[0].mxu0
    %185 = vmatprep.mubr.f32.mxu0 0.0
    %186 = vmatmul.mubr.f32.gmra.mrb[0].mxu0 %v65
    %v187 = vpop.f32.mrb[0].mxu0
    %v188 = vadd.f32 0.0, %v187
    %v189 = vpop.f32.mrb[0].mxu0
    %190 = vmatprep.mubr.f32.mxu0 0.0
    %191 = vmatmul.mubr.f32.gmra.mrb[0].mxu0 %v66
    %v192 = vpop.f32.mrb[0].mxu0
    %v193 = vadd.f32 0.0, %v192
    %v194 = vpop.f32.mrb[0].mxu0
    %195 = vmatprep.mubr.f32.mxu0 0.0
    %196 = vmatmul.mubr.f32.gmra.mrb[0].mxu0 %v67
    %v197 = vpop.f32.mrb[0].mxu0
    %v198 = vadd.f32 0.0, %v197
    %v199 = vpop.f32.mrb[0].mxu0
    %200 = vmatprep.mubr.f32.mxu0 0.0
    %201 = vmatmul.mubr.f32.gmra.mrb[0].mxu0 %v68
    %v202 = vpop.f32.mrb[0].mxu0
    %v203 = vadd.f32 0.0, %v202
    %v204 = vpop.f32.mrb[0].mxu0
    %205 = vmatprep.mubr.f32.mxu0 0.0
    %206 = vmatmul.mubr.f32.gmra.mrb[0].mxu0 %v69
    %v207 = vpop.f32.mrb[0].mxu0
    %v208 = vadd.f32 0.0, %v207
    %v209 = vpop.f32.mrb[0].mxu0
    %210 = vmatprep.mubr.f32.mxu0 0.0
    %211 = vmatmul.mubr.f32.gmra.mrb[0].mxu0 %v70
    %v212 = vpop.f32.mrb[0].mxu0
    %v213 = vadd.f32 0.0, %v212
    %v214 = vpop.f32.mrb[0].mxu0
    %215 = vmatprep.mubr.f32.mxu0 0.0
    %216 = vmatmul.mubr.f32.gmra.mrb[0].mxu0 %v71
    %v217 = vpop.f32.mrb[0].mxu0
    %v218 = vadd.f32 0.0, %v217
    %v219 = vpop.f32.mrb[0].mxu0
    %220 = vmatprep.mubr.f32.mxu0 0.0
    %221 = vmatmul.mubr.f32.gmra.mrb[0].mxu0 %v72
    %v222 = vpop.f32.mrb[0].mxu0
    %v223 = vadd.f32 0.0, %v222
    %v224 = vpop.f32.mrb[0].mxu0
    %225 = vmatprep.mubr.f32.mxu0 0.0
    %226 = vmatmul.mubr.f32.gmra.mrb[0].mxu0 %v73
    %v227 = vpop.f32.mrb[0].mxu0
    %v228 = vadd.f32 0.0, %v227
    %v229 = vpop.f32.mrb[0].mxu0
    %230 = vmatprep.mubr.f32.mxu0 0.0
    %231 = vmatmul.mubr.f32.gmra.mrb[0].mxu0 %v74
    %v232 = vpop.f32.mrb[0].mxu0
    %v233 = vadd.f32 0.0, %v232
    %v234 = vpop.f32.mrb[0].mxu0
    %235 = vdwg.mxu0
    %p236 = scmp.eq.s32.totalorder 0, 0
    // Predicated region
    $region30: #{tpu_custom_call.1} parent=1 // pred_check
      %p237 = pneg %p236
    $region31: #{tpu_custom_call.1} parent=1 // pred_check_branch
      %239 = sbr.rel (%p237) target = $region33
    $region32: #{tpu_custom_call.1} parent=1 // pred_region
      %240 = vst [vmem:[#allocation2] sm:$0xff] %v158
      %241 = vst [vmem:[#allocation2 + $0x8] sm:$0xff] %v163
      %242 = vst [vmem:[#allocation2 + $0x10] sm:$0xff] %v168
      %243 = vst [vmem:[#allocation2 + $0x18] sm:$0xff] %v173
      %244 = vst [vmem:[#allocation2 + $0x20] sm:$0xff] %v178
      %245 = vst [vmem:[#allocation2 + $0x28] sm:$0xff] %v183
      %246 = vst [vmem:[#allocation2 + $0x30] sm:$0xff] %v188
      %247 = vst [vmem:[#allocation2 + $0x38] sm:$0xff] %v193
      %248 = vst [vmem:[#allocation2 + $0x40] sm:$0xff] %v198
      %249 = vst [vmem:[#allocation2 + $0x48] sm:$0xff] %v203
      %250 = vst [vmem:[#allocation2 + $0x50] sm:$0xff] %v208
      %251 = vst [vmem:[#allocation2 + $0x58] sm:$0xff] %v213
      %252 = vst [vmem:[#allocation2 + $0x60] sm:$0xff] %v218
      %253 = vst [vmem:[#allocation2 + $0x68] sm:$0xff] %v223
      %254 = vst [vmem:[#allocation2 + $0x70] sm:$0xff] %v228
      %255 = vst [vmem:[#allocation2 + $0x78] sm:$0xff] %v233
    $region33: #{tpu_custom_call.1} parent=1 // pred_fallthru
      _
    %p256 = scmp.ne.s32.totalorder 0, 0
    // Predicated region
    $region34: #{tpu_custom_call.1} parent=1 // pred_check
      %p257 = pneg %p256
    $region35: #{tpu_custom_call.1} parent=1 // pred_check_branch
      %259 = sbr.rel (%p257) target = $region37
    $region36: #{tpu_custom_call.1} parent=1 // pred_region
      %v260 = vld [vmem:[#allocation2] sm:$0xff]
      %v261 = vld [vmem:[#allocation2 + $0x8] sm:$0xff]
      %v262 = vld [vmem:[#allocation2 + $0x10] sm:$0xff]
      %v263 = vld [vmem:[#allocation2 + $0x18] sm:$0xff]
      %v264 = vld [vmem:[#allocation2 + $0x20] sm:$0xff]
      %v265 = vld [vmem:[#allocation2 + $0x28] sm:$0xff]
      %v266 = vld [vmem:[#allocation2 + $0x30] sm:$0xff]
      %v267 = vld [vmem:[#allocation2 + $0x38] sm:$0xff]
      %v268 = vld [vmem:[#allocation2 + $0x40] sm:$0xff]
      %v269 = vld [vmem:[#allocation2 + $0x48] sm:$0xff]
      %v270 = vld [vmem:[#allocation2 + $0x50] sm:$0xff]
      %v271 = vld [vmem:[#allocation2 + $0x58] sm:$0xff]
      %v272 = vld [vmem:[#allocation2 + $0x60] sm:$0xff]
      %v273 = vld [vmem:[#allocation2 + $0x68] sm:$0xff]
      %v274 = vld [vmem:[#allocation2 + $0x70] sm:$0xff]
      %v275 = vld [vmem:[#allocation2 + $0x78] sm:$0xff]
      %v276 = vadd.f32 %v260, %v158
      %v277 = vadd.f32 %v261, %v163
      %v278 = vadd.f32 %v262, %v168
      %v279 = vadd.f32 %v263, %v173
      %v280 = vadd.f32 %v264, %v178
      %v281 = vadd.f32 %v265, %v183
      %v282 = vadd.f32 %v266, %v188
      %v283 = vadd.f32 %v267, %v193
      %v284 = vadd.f32 %v268, %v198
      %v285 = vadd.f32 %v269, %v203
      %v286 = vadd.f32 %v270, %v208
      %v287 = vadd.f32 %v271, %v213
      %v288 = vadd.f32 %v272, %v218
      %v289 = vadd.f32 %v273, %v223
      %v290 = vadd.f32 %v274, %v228
      %v291 = vadd.f32 %v275, %v233
      %292 = vst [vmem:[#allocation2] sm:$0xff] %v276
      %293 = vst [vmem:[#allocation2 + $0x8] sm:$0xff] %v277
      %294 = vst [vmem:[#allocation2 + $0x10] sm:$0xff] %v278
      %295 = vst [vmem:[#allocation2 + $0x18] sm:$0xff] %v279
      %296 = vst [vmem:[#allocation2 + $0x20] sm:$0xff] %v280
      %297 = vst [vmem:[#allocation2 + $0x28] sm:$0xff] %v281
      %298 = vst [vmem:[#allocation2 + $0x30] sm:$0xff] %v282
      %299 = vst [vmem:[#allocation2 + $0x38] sm:$0xff] %v283
      %300 = vst [vmem:[#allocation2 + $0x40] sm:$0xff] %v284
      %301 = vst [vmem:[#allocation2 + $0x48] sm:$0xff] %v285
      %302 = vst [vmem:[#allocation2 + $0x50] sm:$0xff] %v286
      %303 = vst [vmem:[#allocation2 + $0x58] sm:$0xff] %v287
      %304 = vst [vmem:[#allocation2 + $0x60] sm:$0xff] %v288
      %305 = vst [vmem:[#allocation2 + $0x68] sm:$0xff] %v289
      %306 = vst [vmem:[#allocation2 + $0x70] sm:$0xff] %v290
      %307 = vst [vmem:[#allocation2 + $0x78] sm:$0xff] %v291
    $region37: #{tpu_custom_call.1} parent=1 // pred_fallthru
      _
    // Predicated region
    $region38: #{tpu_custom_call.1} parent=1 // pred_check
      %p308 = pneg %p236
    $region39: #{tpu_custom_call.1} parent=1 // pred_check_branch
      %310 = sbr.rel (%p308) target = $region41
    $region40: #{tpu_custom_call.1} parent=1 // pred_region
      %v311 = vld [vmem:[#allocation2] sm:$0xff]
      %v312 = vld [vmem:[#allocation2 + $0x8] sm:$0xff]
      %v313 = vld [vmem:[#allocation2 + $0x10] sm:$0xff]
      %v314 = vld [vmem:[#allocation2 + $0x18] sm:$0xff]
      %v315 = vld [vmem:[#allocation2 + $0x20] sm:$0xff]
      %v316 = vld [vmem:[#allocation2 + $0x28] sm:$0xff]
      %v317 = vld [vmem:[#allocation2 + $0x30] sm:$0xff]
      %v318 = vld [vmem:[#allocation2 + $0x38] sm:$0xff]
      %v319 = vld [vmem:[#allocation2 + $0x40] sm:$0xff]
      %v320 = vld [vmem:[#allocation2 + $0x48] sm:$0xff]
      %v321 = vld [vmem:[#allocation2 + $0x50] sm:$0xff]
      %v322 = vld [vmem:[#allocation2 + $0x58] sm:$0xff]
      %v323 = vld [vmem:[#allocation2 + $0x60] sm:$0xff]
      %v324 = vld [vmem:[#allocation2 + $0x68] sm:$0xff]
      %v325 = vld [vmem:[#allocation2 + $0x70] sm:$0xff]
      %v326 = vld [vmem:[#allocation2 + $0x78] sm:$0xff]
      %v327 = vld [vmem:[#allocation8] sm:$0xff]
      %v328 = vld [vmem:[#allocation8 + $0x8] sm:$0xff]
      %v329 = vld [vmem:[#allocation8 + $0x10] sm:$0xff]
      %v330 = vld [vmem:[#allocation8 + $0x18] sm:$0xff]
      %v331 = vld [vmem:[#allocation8 + $0x20] sm:$0xff]
      %v332 = vld [vmem:[#allocation8 + $0x28] sm:$0xff]
      %v333 = vld [vmem:[#allocation8 + $0x30] sm:$0xff]
      %v334 = vld [vmem:[#allocation8 + $0x38] sm:$0xff]
      %v335 = vld [vmem:[#allocation8 + $0x40] sm:$0xff]
      %v336 = vld [vmem:[#allocation8 + $0x48] sm:$0xff]
      %v337 = vld [vmem:[#allocation8 + $0x50] sm:$0xff]
      %v338 = vld [vmem:[#allocation8 + $0x58] sm:$0xff]
      %v339 = vld [vmem:[#allocation8 + $0x60] sm:$0xff]
      %v340 = vld [vmem:[#allocation8 + $0x68] sm:$0xff]
      %v341 = vld [vmem:[#allocation8 + $0x70] sm:$0xff]
      %v342 = vld [vmem:[#allocation8 + $0x78] sm:$0xff]
      %v343 = vld [vmem:[%s3] sm:$0x1]
      %v345 = vlaneseq
      %v346 = vshrl.u32 %v345, 7
      %v347 = vsub.s32 0, %v346
      %v348 = vrot.slane %v343, %v347
      %350 = vmatprep.subr.mxu0 0.0
      %351 = vmatpush1.msra.mxu0 %v327
      %352 = vmatprep.subr.mxu0 0.0
      %353 = vmatpush1.msra.mxu0 %v328
      %354 = vmatprep.subr.mxu0 0.0
      %355 = vmatpush1.msra.mxu0 %v329
      %356 = vmatprep.subr.mxu0 0.0
      %357 = vmatpush1.msra.mxu0 %v330
      %358 = vmatprep.subr.mxu0 0.0
      %359 = vmatpush1.msra.mxu0 %v331
      %360 = vmatprep.subr.mxu0 0.0
      %361 = vmatpush1.msra.mxu0 %v332
      %362 = vmatprep.subr.mxu0 0.0
      %363 = vmatpush1.msra.mxu0 %v333
      %364 = vmatprep.subr.mxu0 0.0
      %365 = vmatpush1.msra.mxu0 %v334
      %366 = vmatprep.subr.mxu0 0.0
      %367 = vmatpush1.msra.mxu0 %v335
      %368 = vmatprep.subr.mxu0 0.0
      %369 = vmatpush1.msra.mxu0 %v336
      %370 = vmatprep.subr.mxu0 0.0
      %371 = vmatpush1.msra.mxu0 %v337
      %372 = vmatprep.subr.mxu0 0.0
      %373 = vmatpush1.msra.mxu0 %v338
      %374 = vmatprep.subr.mxu0 0.0
      %375 = vmatpush1.msra.mxu0 %v339
      %376 = vmatprep.subr.mxu0 0.0
      %377 = vmatpush1.msra.mxu0 %v340
      %378 = vmatprep.subr.mxu0 0.0
      %379 = vmatpush1.msra.mxu0 %v341
      %380 = vmatprep.subr.mxu0 0.0
      %381 = vmatpush1.msra.mxu0 %v342
      %382 = vmatprep.subr.mxu0 0.0
      %383 = vmatpush1.msra.mxu0 0.0
      %384 = vmatprep.subr.mxu0 0.0
      %385 = vmatpush1.msra.mxu0 0.0
      %386 = vmatprep.subr.mxu0 0.0
      %387 = vmatpush1.msra.mxu0 0.0
      %388 = vmatprep.subr.mxu0 0.0
      %389 = vmatpush1.msra.mxu0 0.0
      %390 = vmatprep.subr.mxu0 0.0
      %391 = vmatpush1.msra.mxu0 0.0
      %392 = vmatprep.subr.mxu0 0.0
      %393 = vmatpush1.msra.mxu0 0.0
      %394 = vmatprep.subr.mxu0 0.0
      %395 = vmatpush1.msra.mxu0 0.0
      %396 = vmatprep.subr.mxu0 0.0
      %397 = vmatpush1.msra.mxu0 0.0
      %398 = vmatprep.subr.mxu0 0.0
      %399 = vmatpush1.msra.mxu0 0.0
      %400 = vmatprep.subr.mxu0 0.0
      %401 = vmatpush1.msra.mxu0 0.0
      %402 = vmatprep.subr.mxu0 0.0
      %403 = vmatpush1.msra.mxu0 0.0
      %404 = vmatprep.subr.mxu0 0.0
      %405 = vmatpush1.msra.mxu0 0.0
      %406 = vmatprep.subr.mxu0 0.0
      %407 = vmatpush1.msra.mxu0 0.0
      %408 = vmatprep.subr.mxu0 0.0
      %409 = vmatpush1.msra.mxu0 0.0
      %410 = vmatprep.subr.mxu0 0.0
      %411 = vmatpush1.msra.mxu0 0.0
      %412 = vmatprep.subr.mxu0 0.0
      %413 = vmatpush1.msra.mxu0 0.0
      %414 = vmatprep.mubr.f32.mxu0 0.0
      %415 = vmatmul.mubr.f32.gmra.mrb[0].mxu0 %v311
      %v416 = vpop.f32.mrb[0].mxu0
      %v417 = vadd.f32 %v348, %v416
      %v418 = vpop.f32.mrb[0].mxu0
      %419 = vmatprep.mubr.f32.mxu0 0.0
      %420 = vmatmul.mubr.f32.gmra.mrb[0].mxu0 %v312
      %v421 = vpop.f32.mrb[0].mxu0
      %v422 = vadd.f32 %v348, %v421
      %v423 = vpop.f32.mrb[0].mxu0
      %424 = vmatprep.mubr.f32.mxu0 0.0
      %425 = vmatmul.mubr.f32.gmra.mrb[0].mxu0 %v313
      %v426 = vpop.f32.mrb[0].mxu0
      %v427 = vadd.f32 %v348, %v426
      %v428 = vpop.f32.mrb[0].mxu0
      %429 = vmatprep.mubr.f32.mxu0 0.0
      %430 = vmatmul.mubr.f32.gmra.mrb[0].mxu0 %v314
      %v431 = vpop.f32.mrb[0].mxu0
      %v432 = vadd.f32 %v348, %v431
      %v433 = vpop.f32.mrb[0].mxu0
      %434 = vmatprep.mubr.f32.mxu0 0.0
      %435 = vmatmul.mubr.f32.gmra.mrb[0].mxu0 %v315
      %v436 = vpop.f32.mrb[0].mxu0
      %v437 = vadd.f32 %v348, %v436
      %v438 = vpop.f32.mrb[0].mxu0
      %439 = vmatprep.mubr.f32.mxu0 0.0
      %440 = vmatmul.mubr.f32.gmra.mrb[0].mxu0 %v316
      %v441 = vpop.f32.mrb[0].mxu0
      %v442 = vadd.f32 %v348, %v441
      %v443 = vpop.f32.mrb[0].mxu0
      %444 = vmatprep.mubr.f32.mxu0 0.0
      %445 = vmatmul.mubr.f32.gmra.mrb[0].mxu0 %v317
      %v446 = vpop.f32.mrb[0].mxu0
      %v447 = vadd.f32 %v348, %v446
      %v448 = vpop.f32.mrb[0].mxu0
      %449 = vmatprep.mubr.f32.mxu0 0.0
      %450 = vmatmul.mubr.f32.gmra.mrb[0].mxu0 %v318
      %v451 = vpop.f32.mrb[0].mxu0
      %v452 = vadd.f32 %v348, %v451
      %v453 = vpop.f32.mrb[0].mxu0
      %454 = vmatprep.mubr.f32.mxu0 0.0
      %455 = vmatmul.mubr.f32.gmra.mrb[0].mxu0 %v319
      %v456 = vpop.f32.mrb[0].mxu0
      %v457 = vadd.f32 %v348, %v456
      %v458 = vpop.f32.mrb[0].mxu0
      %459 = vmatprep.mubr.f32.mxu0 0.0
      %460 = vmatmul.mubr.f32.gmra.mrb[0].mxu0 %v320
      %v461 = vpop.f32.mrb[0].mxu0
      %v462 = vadd.f32 %v348, %v461
      %v463 = vpop.f32.mrb[0].mxu0
      %464 = vmatprep.mubr.f32.mxu0 0.0
      %465 = vmatmul.mubr.f32.gmra.mrb[0].mxu0 %v321
      %v466 = vpop.f32.mrb[0].mxu0
      %v467 = vadd.f32 %v348, %v466
      %v468 = vpop.f32.mrb[0].mxu0
      %469 = vmatprep.mubr.f32.mxu0 0.0
      %470 = vmatmul.mubr.f32.gmra.mrb[0].mxu0 %v322
      %v471 = vpop.f32.mrb[0].mxu0
      %v472 = vadd.f32 %v348, %v471
      %v473 = vpop.f32.mrb[0].mxu0
      %474 = vmatprep.mubr.f32.mxu0 0.0
      %475 = vmatmul.mubr.f32.gmra.mrb[0].mxu0 %v323
      %v476 = vpop.f32.mrb[0].mxu0
      %v477 = vadd.f32 %v348, %v476
      %v478 = vpop.f32.mrb[0].mxu0
      %479 = vmatprep.mubr.f32.mxu0 0.0
      %480 = vmatmul.mubr.f32.gmra.mrb[0].mxu0 %v324
      %v481 = vpop.f32.mrb[0].mxu0
      %v482 = vadd.f32 %v348, %v481
      %v483 = vpop.f32.mrb[0].mxu0
      %484 = vmatprep.mubr.f32.mxu0 0.0
      %485 = vmatmul.mubr.f32.gmra.mrb[0].mxu0 %v325
      %v486 = vpop.f32.mrb[0].mxu0
      %v487 = vadd.f32 %v348, %v486
      %v488 = vpop.f32.mrb[0].mxu0
      %489 = vmatprep.mubr.f32.mxu0 0.0
      %490 = vmatmul.mubr.f32.gmra.mrb[0].mxu0 %v326
      %v491 = vpop.f32.mrb[0].mxu0
      %v492 = vadd.f32 %v348, %v491
      %v493 = vpop.f32.mrb[0].mxu0
      %494 = vdwg.mxu0
      %495 = vst [vmem:[#allocation9] sm:$0xff] %v417
      %496 = vst [vmem:[#allocation9 + $0x8] sm:$0xff] %v422
      %497 = vst [vmem:[#allocation9 + $0x10] sm:$0xff] %v427
      %498 = vst [vmem:[#allocation9 + $0x18] sm:$0xff] %v432
      %499 = vst [vmem:[#allocation9 + $0x20] sm:$0xff] %v437
      %500 = vst [vmem:[#allocation9 + $0x28] sm:$0xff] %v442
      %501 = vst [vmem:[#allocation9 + $0x30] sm:$0xff] %v447
      %502 = vst [vmem:[#allocation9 + $0x38] sm:$0xff] %v452
      %503 = vst [vmem:[#allocation9 + $0x40] sm:$0xff] %v457
      %504 = vst [vmem:[#allocation9 + $0x48] sm:$0xff] %v462
      %505 = vst [vmem:[#allocation9 + $0x50] sm:$0xff] %v467
      %506 = vst [vmem:[#allocation9 + $0x58] sm:$0xff] %v472
      %507 = vst [vmem:[#allocation9 + $0x60] sm:$0xff] %v477
      %508 = vst [vmem:[#allocation9 + $0x68] sm:$0xff] %v482
      %509 = vst [vmem:[#allocation9 + $0x70] sm:$0xff] %v487
      %510 = vst [vmem:[#allocation9 + $0x78] sm:$0xff] %v492
    $region41: #{tpu_custom_call.1} parent=1 // pred_fallthru
      _
    // Predicated region
    $region42: #{tpu_custom_call.1} parent=1 // pred_check
      _
    $region43: #{tpu_custom_call.1} parent=1 // pred_check_branch
      %512 = sbr.rel (0) target = $region45
    $region44: #{tpu_custom_call.1} parent=1 // pred_region
      %s514 = ssub.s32 2048, 2048
      %515 = vsyncadd [#allocation5], %s514
      %s516 = sshll.u32 [#allocation9], 4
      %s517 = int_to_ptr.vmem [resolvable:$true] %s516
      %522 = dma.vmem_to_hbm [thread:$0]  %s517, 2048, %s4, [#allocation5], 128, 128, 8
    $region45: #{tpu_custom_call.1} parent=1 // pred_fallthru
      _
    // Predicated region
    $region46: #{tpu_custom_call.1} parent=1 // pred_check
      _
    $region47: #{tpu_custom_call.1} parent=1 // pred_check_branch
      %524 = sbr.rel (0) target = $region49
    $region48: #{tpu_custom_call.1} parent=1 // pred_region
      %525 = dma.done [#allocation5], 2048
    $region49: #{tpu_custom_call.1} parent=1 // pred_fallthru
      _
    %526 = vsyncpa [#allocation4], 1
    %527 = vsyncpa [#allocation7], 1
    %528 = vsyncpa [#allocation5], 1

</llo_original>
